<compile_context>
chip_gen: v6e
topology: v6e:2x2x1
jax: 0.10.0
libtpu: 0.0.40
codegen_flags: <defaults>
</compile_context>

<pallas_src>
import functools

import jax
import jax.numpy as jnp
from jax.experimental import pallas as pl
from jax.experimental.pallas import tpu as pltpu


def _round_up(a, b):
    return (a + b - 1) // b * b


def _choose_tile(n_rows, tile_rows):
    """Pick a sublane-aligned row tile.

    Large tiles amortize per-grid-step overhead; for big inputs keep >= 4 grid
    steps (v7x has 2 TensorCores) as long as tiles stay >= 1024 rows; prefer a
    tile that divides n_rows exactly so no padding / output-slice copies.
    """
    n8 = _round_up(n_rows, 8)
    tile = max(8, min(tile_rows, n8))
    tile -= tile % 8
    while _round_up(n_rows, tile) // tile < 4 and tile // 2 >= 1024:
        tile = (tile // 2) // 8 * 8
    if n_rows % tile:
        for cand in range(tile, max(8, tile // 2) - 1, -8):
            if n_rows % cand == 0:
                return cand
    return tile


def grn_kernel(
    x_ref,      # (tile, IN)    f32
    c_ref,      # (tile, CTX)   f32
    wp_ref,     # (IN, OUT)     bf16   projection
    w1_ref,     # (IN, HID)     bf16   fc1
    w3_ref,     # (CTX, HID)    bf16   fc3 (no bias)
    w2_ref,     # (HID, OUT)    bf16   fc2
    wga_ref,    # (OUT, OUT)    bf16   GLU value
    wgb_ref,    # (OUT, OUT)    bf16   GLU gate
    bias_ref,   # (8, P)        f32    rows: bp, b1, b2, bga, bgb, gamma, beta, 0
    o_ref,      # (tile, OUT)
    *, hidden_dim, output_dim,
):
    f32 = jnp.float32
    bf = jnp.bfloat16
    xb = x_ref[...].astype(bf)
    cb = c_ref[...].astype(bf)

    bp = bias_ref[0:1, :output_dim]
    b1 = bias_ref[1:2, :hidden_dim]
    b2 = bias_ref[2:3, :output_dim]
    bga = bias_ref[3:4, :output_dim]
    bgb = bias_ref[4:5, :output_dim]
    gamma = bias_ref[5:6, :output_dim]
    beta = bias_ref[6:7, :output_dim]

    # Residual projection (linear, since input_dim != output_dim).
    residual = jnp.dot(xb, wp_ref[...], preferred_element_type=f32) + bp

    # fc1(x) + fc3(context); separate dots share the same LHS vregs (MXU slack
    # is huge at these K) and avoid non-lane-aligned result slices.
    h = (
        jnp.dot(xb, w1_ref[...], preferred_element_type=f32)
        + jnp.dot(cb, w3_ref[...], preferred_element_type=f32)
        + b1
    )
    # ELU (alpha = 1); exp argument clamped so padded rows can't create inf/NaN.
    h = jnp.where(h > 0, h, jnp.exp(jnp.minimum(h, 0.0)) - 1.0)

    # fc2
    h4 = jnp.dot(h.astype(bf), w2_ref[...], preferred_element_type=f32) + b2
    h4b = h4.astype(bf)

    # GLU: value * sigmoid(gate)
    val = jnp.dot(h4b, wga_ref[...], preferred_element_type=f32) + bga
    gate = jnp.dot(h4b, wgb_ref[...], preferred_element_type=f32) + bgb
    glu = val * jax.nn.sigmoid(gate)

    # Residual add + LayerNorm (eps = 1e-5, affine).
    y = glu + residual
    mean = jnp.mean(y, axis=-1, keepdims=True)
    var = jnp.mean(jnp.square(y - mean), axis=-1, keepdims=True)
    yn = (y - mean) * jax.lax.rsqrt(var + 1e-5)
    o_ref[...] = (yn * gamma + beta).astype(o_ref.dtype)


@functools.partial(jax.jit, static_argnames=("tile_rows",))
def grn_forward(x, context, params, *, tile_rows=2048):
    """x: (batch, seq, input_dim); context: (batch, seq, context_dim)."""
    B, S, IN = x.shape
    CTX = context.shape[-1]
    HID = params["w1"].shape[1]
    OUT = params["wp"].shape[1]
    N = B * S

    tile = _choose_tile(N, tile_rows)
    n_pad = _round_up(N, tile)

    x2 = x.reshape(N, IN)
    c2 = context.reshape(N, CTX)
    if n_pad != N:  # usually avoided by _choose_tile's exact-division preference
        x2 = jnp.pad(x2, ((0, n_pad - N), (0, 0)))
        c2 = jnp.pad(c2, ((0, n_pad - N), (0, 0)))

    bf = jnp.bfloat16
    f32 = jnp.float32
    wp = params["wp"].astype(bf)
    w1 = params["w1"].astype(bf)
    w3 = params["w3"].astype(bf)
    w2 = params["w2"].astype(bf)
    wga = params["wga"].astype(bf)
    wgb = params["wgb"].astype(bf)

    # Coalesce the seven tiny f32 vectors into one (8, P) slab (single BlockSpec).
    P = _round_up(max(OUT, HID), 128)

    def _row(v):
        v = v.reshape(1, -1).astype(f32)
        return jnp.pad(v, ((0, 0), (0, P - v.shape[-1])))

    bias_slab = jnp.concatenate(
        [
            _row(params["bp"]), _row(params["b1"]), _row(params["b2"]),
            _row(params["bga"]), _row(params["bgb"]),
            _row(params["gamma"]), _row(params["beta"]),
            jnp.zeros((1, P), f32),
        ],
        axis=0,
    )

    full = lambda i: (0, 0)  # noqa: E731

    out = pl.pallas_call(
        functools.partial(grn_kernel, hidden_dim=HID, output_dim=OUT),
        out_shape=jax.ShapeDtypeStruct((n_pad, OUT), x.dtype),
        grid_spec=pltpu.PrefetchScalarGridSpec(
            num_scalar_prefetch=0,
            grid=(n_pad // tile,),
            in_specs=[
                pl.BlockSpec((tile, IN), lambda i: (i, 0)),    # x rows
                pl.BlockSpec((tile, CTX), lambda i: (i, 0)),   # context rows
                pl.BlockSpec(wp.shape, full),                  # Wp
                pl.BlockSpec(w1.shape, full),                  # W1
                pl.BlockSpec(w3.shape, full),                  # W3
                pl.BlockSpec(w2.shape, full),                  # W2
                pl.BlockSpec(wga.shape, full),                 # GLU value W
                pl.BlockSpec(wgb.shape, full),                 # GLU gate W
                pl.BlockSpec(bias_slab.shape, full),           # bias/affine slab
            ],
            out_specs=pl.BlockSpec((tile, OUT), lambda i: (i, 0)),
        ),
        compiler_params=pltpu.CompilerParams(
            dimension_semantics=("parallel",),
            # 32 MiB: safe on v7x (64 MiB/TC physical), raises v5e's 16 MiB
            # default scoped limit; footprint at tile=2048 is only a few MiB.
            vmem_limit_bytes=32 * 1024 * 1024,
        ),
    )(x2, c2, wp, w1, w3, w2, wga, wgb, bias_slab)

    if n_pad != N:
        out = out[:N]
    return out.reshape(B, S, OUT)


def grn_reference(x, context, params):
    """Plain-JAX reference using the same bf16-operand / f32-accumulate recipe."""
    bf = jnp.bfloat16
    xb = x.astype(bf)
    cb = context.astype(bf)
    dot = lambda a, w: jnp.dot(  # noqa: E731
        a, w.astype(bf), preferred_element_type=jnp.float32
    )
    residual = dot(xb, params["wp"]) + params["bp"]
    h = dot(xb, params["w1"]) + params["b1"] + dot(cb, params["w3"])
    h = jnp.where(h > 0, h, jnp.exp(jnp.minimum(h, 0.0)) - 1.0)
    h4 = dot(h.astype(bf), params["w2"]) + params["b2"]
    glu = (dot(h4.astype(bf), params["wga"]) + params["bga"]) * jax.nn.sigmoid(
        dot(h4.astype(bf), params["wgb"]) + params["bgb"]
    )
    y = glu + residual
    mean = jnp.mean(y, axis=-1, keepdims=True)
    var = jnp.mean(jnp.square(y - mean), axis=-1, keepdims=True)
    yn = (y - mean) * jax.lax.rsqrt(var + 1e-5)
    return yn * params["gamma"] + params["beta"]


def init_params(key, input_dim, hidden_dim, context_dim, output_dim):
    """Deterministic synthetic init (mirrors torch init *strategy*, not values).

    Weights stored transposed: (in_features, out_features). Biases zero-init
    (GRN.initialize_parameters zeroes every bias)."""
    ks = jax.random.split(key, 6)
    kaiming = lambda k, fi, fo: (  # noqa: E731
        jax.random.normal(k, (fi, fo), jnp.float32) * jnp.sqrt(2.0 / fi)
    )
    xavier = lambda k, fi, fo: (  # noqa: E731
        jax.random.uniform(k, (fi, fo), jnp.float32, -1.0, 1.0)
        * jnp.sqrt(6.0 / (fi + fo))
    )

    wg_full = kaiming(ks[4], output_dim, 2 * output_dim) * 0.5  # GLU default-ish init
    return {
        "wp": xavier(ks[0], input_dim, output_dim),            # project (linear)
        "bp": jnp.zeros((1, output_dim), jnp.float32),
        "w1": kaiming(ks[1], input_dim, hidden_dim),           # fc1
        "b1": jnp.zeros((1, hidden_dim), jnp.float32),
        "w3": xavier(ks[2], context_dim, hidden_dim),          # fc3 (no bias)
        "w2": kaiming(ks[3], hidden_dim, output_dim),          # fc2
        "b2": jnp.zeros((1, output_dim), jnp.float32),
        "wga": wg_full[:, :output_dim],                        # GLU value half
        "bga": jnp.zeros((1, output_dim), jnp.float32),
        "wgb": wg_full[:, output_dim:],                        # GLU gate half
        "bgb": jnp.zeros((1, output_dim), jnp.float32),
        "gamma": jnp.ones((1, output_dim), jnp.float32),       # LayerNorm weight
        "beta": jnp.zeros((1, output_dim), jnp.float32),       # LayerNorm bias
    }


if __name__ == "__main__":
    batch, seq = 2, 8
    input_dim, hidden_dim, context_dim, output_dim = 32, 32, 16, 64

    key = jax.random.PRNGKey(0)
    kx, kc, kp = jax.random.split(key, 3)
    x = jax.random.normal(kx, (batch, seq, input_dim), jnp.float32)
    context = jax.random.normal(kc, (batch, seq, context_dim), jnp.float32)
    params = init_params(kp, input_dim, hidden_dim, context_dim, output_dim)

    out = grn_forward(x, context, params)
    out = jax.block_until_ready(out)

    ref = grn_reference(x, context, params)
    assert out.shape == (batch, seq, output_dim), out.shape
    assert jnp.allclose(out, ref, atol=1e-2, rtol=1e-2), (
        float(jnp.max(jnp.abs(out - ref)))
    )
    print("KERNEL_OK")
</pallas_src>

<mosaic_0001>
module attributes {stable_mosaic.version = 11 : i64} {
  func.func @grn_kernel(%arg0: i32, %arg1: memref<16x32xf32, #tpu.memory_space<vmem>>, %arg2: memref<16x16xf32, #tpu.memory_space<vmem>>, %arg3: memref<32x64xbf16, #tpu.memory_space<vmem>>, %arg4: memref<32x32xbf16, #tpu.memory_space<vmem>>, %arg5: memref<16x32xbf16, #tpu.memory_space<vmem>>, %arg6: memref<32x64xbf16, #tpu.memory_space<vmem>>, %arg7: memref<64x64xbf16, #tpu.memory_space<vmem>>, %arg8: memref<64x64xbf16, #tpu.memory_space<vmem>>, %arg9: memref<8x128xf32, #tpu.memory_space<vmem>>, %arg10: memref<16x64xf32, #tpu.memory_space<vmem>>) attributes {dimension_semantics = [#tpu.dimension_semantics<parallel>], iteration_bounds = array<i64: 1>, scalar_prefetch = 0 : i64, scratch_operands = 0 : i64, tpu.core_type = #tpu.core_type<tc>, window_params = [{transform_indices = @transform_0, window_bounds = array<i64: 16, 32>}, {transform_indices = @transform_1, window_bounds = array<i64: 16, 16>}, {pipeline_mode = #tpu.pipeline_mode<synchronous>, transform_indices = @transform_2, window_bounds = array<i64: 32, 64>}, {pipeline_mode = #tpu.pipeline_mode<synchronous>, transform_indices = @transform_3, window_bounds = array<i64: 32, 32>}, {pipeline_mode = #tpu.pipeline_mode<synchronous>, transform_indices = @transform_4, window_bounds = array<i64: 16, 32>}, {pipeline_mode = #tpu.pipeline_mode<synchronous>, transform_indices = @transform_5, window_bounds = array<i64: 32, 64>}, {pipeline_mode = #tpu.pipeline_mode<synchronous>, transform_indices = @transform_6, window_bounds = array<i64: 64, 64>}, {pipeline_mode = #tpu.pipeline_mode<synchronous>, transform_indices = @transform_7, window_bounds = array<i64: 64, 64>}, {pipeline_mode = #tpu.pipeline_mode<synchronous>, transform_indices = @transform_8, window_bounds = array<i64: 8, 128>}, {transform_indices = @transform_9, window_bounds = array<i64: 16, 64>}]} {
    %c0 = arith.constant 0 : index
    %c0_0 = arith.constant 0 : index
    %0 = vector.load %arg1[%c0, %c0_0] : memref<16x32xf32, #tpu.memory_space<vmem>>, vector<16x32xf32>
    %1 = arith.truncf %0 : vector<16x32xf32> to vector<16x32xbf16>
    %c0_1 = arith.constant 0 : index
    %c0_2 = arith.constant 0 : index
    %2 = vector.load %arg2[%c0_1, %c0_2] : memref<16x16xf32, #tpu.memory_space<vmem>>, vector<16x16xf32>
    %3 = arith.truncf %2 : vector<16x16xf32> to vector<16x16xbf16>
    %c0_3 = arith.constant 0 : index
    %c0_4 = arith.constant 0 : index
    %4 = vector.load %arg9[%c0_3, %c0_4] : memref<8x128xf32, #tpu.memory_space<vmem>>, vector<1x64xf32>
    %c1 = arith.constant 1 : index
    %c0_5 = arith.constant 0 : index
    %5 = vector.load %arg9[%c1, %c0_5] : memref<8x128xf32, #tpu.memory_space<vmem>>, vector<1x32xf32>
    %c2 = arith.constant 2 : index
    %c0_6 = arith.constant 0 : index
    %6 = vector.load %arg9[%c2, %c0_6] : memref<8x128xf32, #tpu.memory_space<vmem>>, vector<1x64xf32>
    %c3 = arith.constant 3 : index
    %c0_7 = arith.constant 0 : index
    %7 = vector.load %arg9[%c3, %c0_7] : memref<8x128xf32, #tpu.memory_space<vmem>>, vector<1x64xf32>
    %c4 = arith.constant 4 : index
    %c0_8 = arith.constant 0 : index
    %8 = vector.load %arg9[%c4, %c0_8] : memref<8x128xf32, #tpu.memory_space<vmem>>, vector<1x64xf32>
    %c5 = arith.constant 5 : index
    %c0_9 = arith.constant 0 : index
    %9 = vector.load %arg9[%c5, %c0_9] : memref<8x128xf32, #tpu.memory_space<vmem>>, vector<1x64xf32>
    %c6 = arith.constant 6 : index
    %c0_10 = arith.constant 0 : index
    %10 = vector.load %arg9[%c6, %c0_10] : memref<8x128xf32, #tpu.memory_space<vmem>>, vector<1x64xf32>
    %c0_11 = arith.constant 0 : index
    %c0_12 = arith.constant 0 : index
    %11 = vector.load %arg3[%c0_11, %c0_12] : memref<32x64xbf16, #tpu.memory_space<vmem>>, vector<32x64xbf16>
    %cst = arith.constant dense<0.000000e+00> : vector<16x64xf32>
    %12 = tpu.matmul %1, %11, %cst {dimension_numbers = #tpu.dot_dimension_numbers<[1], [0], [0], [1], [0, 0, 1, 1], [], []>} : vector<16x32xbf16>, vector<32x64xbf16>, vector<16x64xf32> -> vector<16x64xf32>
    %13 = vector.broadcast %4 : vector<1x64xf32> to vector<16x64xf32>
    %14 = arith.addf %12, %13 : vector<16x64xf32>
    %c0_13 = arith.constant 0 : index
    %c0_14 = arith.constant 0 : index
    %15 = vector.load %arg4[%c0_13, %c0_14] : memref<32x32xbf16, #tpu.memory_space<vmem>>, vector<32x32xbf16>
    %cst_15 = arith.constant dense<0.000000e+00> : vector<16x32xf32>
    %16 = tpu.matmul %1, %15, %cst_15 {dimension_numbers = #tpu.dot_dimension_numbers<[1], [0], [0], [1], [0, 0, 1, 1], [], []>} : vector<16x32xbf16>, vector<32x32xbf16>, vector<16x32xf32> -> vector<16x32xf32>
    %c0_16 = arith.constant 0 : index
    %c0_17 = arith.constant 0 : index
    %17 = vector.load %arg5[%c0_16, %c0_17] : memref<16x32xbf16, #tpu.memory_space<vmem>>, vector<16x32xbf16>
    %cst_18 = arith.constant dense<0.000000e+00> : vector<16x32xf32>
    %18 = tpu.matmul %3, %17, %cst_18 {dimension_numbers = #tpu.dot_dimension_numbers<[1], [0], [0], [1], [0, 0, 1, 1], [], []>} : vector<16x16xbf16>, vector<16x32xbf16>, vector<16x32xf32> -> vector<16x32xf32>
    %19 = arith.addf %16, %18 : vector<16x32xf32>
    %20 = vector.broadcast %5 : vector<1x32xf32> to vector<16x32xf32>
    %21 = arith.addf %19, %20 : vector<16x32xf32>
    %cst_19 = arith.constant 0.000000e+00 : f32
    %22 = vector.broadcast %cst_19 : f32 to vector<16x32xf32>
    %23 = arith.cmpf ogt, %21, %22 : vector<16x32xf32>
    %cst_20 = arith.constant 0.000000e+00 : f32
    %24 = vector.broadcast %cst_20 : f32 to vector<16x32xf32>
    %25 = arith.minimumf %21, %24 : vector<16x32xf32>
    %26 = math.exp %25 : vector<16x32xf32>
    %cst_21 = arith.constant 1.000000e+00 : f32
    %27 = vector.broadcast %cst_21 : f32 to vector<16x32xf32>
    %28 = arith.subf %26, %27 : vector<16x32xf32>
    %29 = arith.select %23, %21, %28 : vector<16x32xi1>, vector<16x32xf32>
    %30 = arith.truncf %29 : vector<16x32xf32> to vector<16x32xbf16>
    %c0_22 = arith.constant 0 : index
    %c0_23 = arith.constant 0 : index
    %31 = vector.load %arg6[%c0_22, %c0_23] : memref<32x64xbf16, #tpu.memory_space<vmem>>, vector<32x64xbf16>
    %cst_24 = arith.constant dense<0.000000e+00> : vector<16x64xf32>
    %32 = tpu.matmul %30, %31, %cst_24 {dimension_numbers = #tpu.dot_dimension_numbers<[1], [0], [0], [1], [0, 0, 1, 1], [], []>} : vector<16x32xbf16>, vector<32x64xbf16>, vector<16x64xf32> -> vector<16x64xf32>
    %33 = vector.broadcast %6 : vector<1x64xf32> to vector<16x64xf32>
    %34 = arith.addf %32, %33 : vector<16x64xf32>
    %35 = arith.truncf %34 : vector<16x64xf32> to vector<16x64xbf16>
    %c0_25 = arith.constant 0 : index
    %c0_26 = arith.constant 0 : index
    %36 = vector.load %arg7[%c0_25, %c0_26] : memref<64x64xbf16, #tpu.memory_space<vmem>>, vector<64x64xbf16>
    %cst_27 = arith.constant dense<0.000000e+00> : vector<16x64xf32>
    %37 = tpu.matmul %35, %36, %cst_27 {dimension_numbers = #tpu.dot_dimension_numbers<[1], [0], [0], [1], [0, 0, 1, 1], [], []>} : vector<16x64xbf16>, vector<64x64xbf16>, vector<16x64xf32> -> vector<16x64xf32>
    %38 = vector.broadcast %7 : vector<1x64xf32> to vector<16x64xf32>
    %39 = arith.addf %37, %38 : vector<16x64xf32>
    %c0_28 = arith.constant 0 : index
    %c0_29 = arith.constant 0 : index
    %40 = vector.load %arg8[%c0_28, %c0_29] : memref<64x64xbf16, #tpu.memory_space<vmem>>, vector<64x64xbf16>
    %cst_30 = arith.constant dense<0.000000e+00> : vector<16x64xf32>
    %41 = tpu.matmul %35, %40, %cst_30 {dimension_numbers = #tpu.dot_dimension_numbers<[1], [0], [0], [1], [0, 0, 1, 1], [], []>} : vector<16x64xbf16>, vector<64x64xbf16>, vector<16x64xf32> -> vector<16x64xf32>
    %42 = vector.broadcast %8 : vector<1x64xf32> to vector<16x64xf32>
    %43 = arith.addf %41, %42 : vector<16x64xf32>
    %44 = arith.negf %43 : vector<16x64xf32>
    %45 = math.exp %44 : vector<16x64xf32>
    %cst_31 = arith.constant 1.000000e+00 : f32
    %46 = vector.broadcast %cst_31 : f32 to vector<16x64xf32>
    %47 = arith.addf %46, %45 : vector<16x64xf32>
    %48 = arith.divf %46, %47 : vector<16x64xf32>
    %49 = arith.mulf %39, %48 : vector<16x64xf32>
    %50 = arith.addf %49, %14 : vector<16x64xf32>
    %cst_32 = arith.constant dense<0.000000e+00> : vector<16xf32>
    %51 = vector.multi_reduction <add>, %50, %cst_32 [1] : vector<16x64xf32> to vector<16xf32>
    %52 = vector.shape_cast %51 : vector<16xf32> to vector<16x1xf32>
    %cst_33 = arith.constant 6.400000e+01 : f32
    %53 = vector.broadcast %cst_33 : f32 to vector<16x1xf32>
    %54 = arith.divf %52, %53 : vector<16x1xf32>
    %55 = vector.broadcast %54 : vector<16x1xf32> to vector<16x64xf32>
    %56 = arith.subf %50, %55 : vector<16x64xf32>
    %57 = arith.mulf %56, %56 : vector<16x64xf32>
    %cst_34 = arith.constant dense<0.000000e+00> : vector<16xf32>
    %58 = vector.multi_reduction <add>, %57, %cst_34 [1] : vector<16x64xf32> to vector<16xf32>
    %59 = vector.shape_cast %58 : vector<16xf32> to vector<16x1xf32>
    %cst_35 = arith.constant 6.400000e+01 : f32
    %60 = vector.broadcast %cst_35 : f32 to vector<16x1xf32>
    %61 = arith.divf %59, %60 : vector<16x1xf32>
    %62 = vector.broadcast %54 : vector<16x1xf32> to vector<16x64xf32>
    %63 = arith.subf %50, %62 : vector<16x64xf32>
    %cst_36 = arith.constant 9.99999974E-6 : f32
    %64 = vector.broadcast %cst_36 : f32 to vector<16x1xf32>
    %65 = arith.addf %61, %64 : vector<16x1xf32>
    %66 = math.rsqrt %65 : vector<16x1xf32>
    %67 = vector.broadcast %66 : vector<16x1xf32> to vector<16x64xf32>
    %68 = arith.mulf %63, %67 : vector<16x64xf32>
    %69 = vector.broadcast %9 : vector<1x64xf32> to vector<16x64xf32>
    %70 = arith.mulf %68, %69 : vector<16x64xf32>
    %71 = vector.broadcast %10 : vector<1x64xf32> to vector<16x64xf32>
    %72 = arith.addf %70, %71 : vector<16x64xf32>
    %c0_37 = arith.constant 0 : index
    %c0_38 = arith.constant 0 : index
    %73 = vector.load %arg10[%c0_37, %c0_38] : memref<16x64xf32, #tpu.memory_space<vmem>>, vector<16x64xf32>
    tpu.vector_store %arg10[%c0_37, %c0_38], %72 {strides = array<i32>} : memref<16x64xf32, #tpu.memory_space<vmem>>, vector<16x64xf32>,
    return
  }
  func.func @transform_0(%arg0: i32) -> (i32, i32) {
    %c0_i32 = arith.constant 0 : i32
    %c0_i32_0 = arith.constant 0 : i32
    return %arg0, %c0_i32 : i32, i32
  }
  func.func @transform_1(%arg0: i32) -> (i32, i32) {
    %c0_i32 = arith.constant 0 : i32
    %c0_i32_0 = arith.constant 0 : i32
    return %arg0, %c0_i32 : i32, i32
  }
  func.func @transform_2(%arg0: i32) -> (i32, i32) {
    %c0_i32 = arith.constant 0 : i32
    %c0_i32_0 = arith.constant 0 : i32
    %c0_i32_1 = arith.constant 0 : i32
    return %c0_i32, %c0_i32_0 : i32, i32
  }
  func.func @transform_3(%arg0: i32) -> (i32, i32) {
    %c0_i32 = arith.constant 0 : i32
    %c0_i32_0 = arith.constant 0 : i32
    %c0_i32_1 = arith.constant 0 : i32
    return %c0_i32, %c0_i32_0 : i32, i32
  }
  func.func @transform_4(%arg0: i32) -> (i32, i32) {
    %c0_i32 = arith.constant 0 : i32
    %c0_i32_0 = arith.constant 0 : i32
    %c0_i32_1 = arith.constant 0 : i32
    return %c0_i32, %c0_i32_0 : i32, i32
  }
  func.func @transform_5(%arg0: i32) -> (i32, i32) {
    %c0_i32 = arith.constant 0 : i32
    %c0_i32_0 = arith.constant 0 : i32
    %c0_i32_1 = arith.constant 0 : i32
    return %c0_i32, %c0_i32_0 : i32, i32
  }
  func.func @transform_6(%arg0: i32) -> (i32, i32) {
    %c0_i32 = arith.constant 0 : i32
    %c0_i32_0 = arith.constant 0 : i32
    %c0_i32_1 = arith.constant 0 : i32
    return %c0_i32, %c0_i32_0 : i32, i32
  }
  func.func @transform_7(%arg0: i32) -> (i32, i32) {
    %c0_i32 = arith.constant 0 : i32
    %c0_i32_0 = arith.constant 0 : i32
    %c0_i32_1 = arith.constant 0 : i32
    return %c0_i32, %c0_i32_0 : i32, i32
  }
  func.func @transform_8(%arg0: i32) -> (i32, i32) {
    %c0_i32 = arith.constant 0 : i32
    %c0_i32_0 = arith.constant 0 : i32
    %c0_i32_1 = arith.constant 0 : i32
    return %c0_i32, %c0_i32_0 : i32, i32
  }
  func.func @transform_9(%arg0: i32) -> (i32, i32) {
    %c0_i32 = arith.constant 0 : i32
    %c0_i32_0 = arith.constant 0 : i32
    return %arg0, %c0_i32 : i32, i32
  }
}

</mosaic_0001>

<llo_original>
// kernel: grn_forward.1
$region0: #{grn_forward.1}
  #allocation0 [shape = 'u32[]', space=smem, size = 0x4, offset = 0x4, fixed_abs, tag = 'smem constant byte address 0x4 - core index']
  #allocation1 [shape = 'u32[144,128]{1,0:T(1,128)}', space=vmem, size = 0x12000, scoped, tag = 'internal scratch']
  %s0 = inlined_call_operand.vmem [shape: f32[16,32], index: 0, kind: input, shape index: {}]
  %s1 = inlined_call_operand.vmem [shape: f32[16,16], index: 1, kind: input, shape index: {}]
  %s2 = inlined_call_operand.vmem [shape: bf16[32,64], index: 2, kind: input, shape index: {}]
  %s3 = inlined_call_operand.vmem [shape: bf16[32,32], index: 3, kind: input, shape index: {}]
  %s4 = inlined_call_operand.vmem [shape: bf16[16,32], index: 4, kind: input, shape index: {}]
  %s5 = inlined_call_operand.vmem [shape: bf16[32,64], index: 5, kind: input, shape index: {}]
  %s6 = inlined_call_operand.vmem [shape: bf16[64,64], index: 6, kind: input, shape index: {}]
  %s7 = inlined_call_operand.vmem [shape: bf16[64,64], index: 7, kind: input, shape index: {}]
  %s8 = inlined_call_operand.vmem [shape: f32[8,128], index: 8, kind: input, shape index: {}]
  %s9 = inlined_call_operand.hbm [shape: f32[16,64], index: 9, kind: output, shape index: {}]
  %s10 = sld [smem:[#allocation0]]
  $region46: #{grn_forward.1} parent=0
    _
  %s12 = ssub.s32 1, %s10
  %s13 = scalar_select 0, %s12, %s10
  $region1: #{grn_forward.1} parent=0
    #allocation2 [shape = 'u8[8192]{0}', space=vmem, size = 0x2000, scoped, tag = 'output window, operand 0, single buffered']
    #allocation3 [shape = 's32[1]{0}', space=sflag, size = 0x4, scoped, tag = 'scoped memory for grn_forward.1']
    %14 = vsyncpa [#allocation3], 0
    // Predicated region
    $region2: #{grn_forward.1} parent=1 // pred_check
      _
    $region3: #{grn_forward.1} parent=1 // pred_check_branch
      %16 = sbr.rel (0) target = $region5
    $region4: #{grn_forward.1} parent=1 // pred_region
      _
    $region5: #{grn_forward.1} parent=1 // pred_fallthru
      _
    // Predicated region
    $region6: #{grn_forward.1} parent=1 // pred_check
      _
    $region7: #{grn_forward.1} parent=1 // pred_check_branch
      %18 = sbr.rel (0) target = $region9
    $region8: #{grn_forward.1} parent=1 // pred_region
      _
    $region9: #{grn_forward.1} parent=1 // pred_fallthru
      _
    // Predicated region
    $region10: #{grn_forward.1} parent=1 // pred_check
      _
    $region11: #{grn_forward.1} parent=1 // pred_check_branch
      %20 = sbr.rel (0) target = $region13
    $region12: #{grn_forward.1} parent=1 // pred_region
      _
    $region13: #{grn_forward.1} parent=1 // pred_fallthru
      _
    // Predicated region
    $region14: #{grn_forward.1} parent=1 // pred_check
      _
    $region15: #{grn_forward.1} parent=1 // pred_check_branch
      %22 = sbr.rel (0) target = $region17
    $region16: #{grn_forward.1} parent=1 // pred_region
      _
    $region17: #{grn_forward.1} parent=1 // pred_fallthru
      _
    // Predicated region
    $region18: #{grn_forward.1} parent=1 // pred_check
      _
    $region19: #{grn_forward.1} parent=1 // pred_check_branch
      %24 = sbr.rel (0) target = $region21
    $region20: #{grn_forward.1} parent=1 // pred_region
      _
    $region21: #{grn_forward.1} parent=1 // pred_fallthru
      _
    // Predicated region
    $region22: #{grn_forward.1} parent=1 // pred_check
      _
    $region23: #{grn_forward.1} parent=1 // pred_check_branch
      %26 = sbr.rel (0) target = $region25
    $region24: #{grn_forward.1} parent=1 // pred_region
      _
    $region25: #{grn_forward.1} parent=1 // pred_fallthru
      _
    // Predicated region
    $region26: #{grn_forward.1} parent=1 // pred_check
      _
    $region27: #{grn_forward.1} parent=1 // pred_check_branch
      %28 = sbr.rel (0) target = $region29
    $region28: #{grn_forward.1} parent=1 // pred_region
      _
    $region29: #{grn_forward.1} parent=1 // pred_fallthru
      _
    // Predicated region
    $region30: #{grn_forward.1} parent=1 // pred_check
      _
    $region31: #{grn_forward.1} parent=1 // pred_check_branch
      %30 = sbr.rel (0) target = $region33
    $region32: #{grn_forward.1} parent=1 // pred_region
      _
    $region33: #{grn_forward.1} parent=1 // pred_fallthru
      _
    // Predicated region
    $region34: #{grn_forward.1} parent=1 // pred_check
      _
    $region35: #{grn_forward.1} parent=1 // pred_check_branch
      %32 = sbr.rel (0) target = $region37
    $region36: #{grn_forward.1} parent=1 // pred_region
      _
    $region37: #{grn_forward.1} parent=1 // pred_fallthru
      _
    %v34 = vld [vmem:[%s0] sm:$0xff]
    %v35 = vld [vmem:[%s0 + $0x8] sm:$0xff]
    %v36 = vpack.c.bf16 %v35, %v34
    %v37 = vld [vmem:[%s1] sm:$0xff]
    %v38 = vld [vmem:[%s1 + $0x8] sm:$0xff]
    %v39 = vpack.c.bf16 %v38, %v37
    %v40 = vld [vmem:[%s8] sm:$0x1]
    %v41 = vld [vmem:[%s8 + $0x1] sm:$0x1]
    %v42 = vld [vmem:[%s8 + $0x2] sm:$0x1]
    %v43 = vld [vmem:[%s8 + $0x3] sm:$0x1]
    %v44 = vld [vmem:[%s8 + $0x4] sm:$0x1]
    %v45 = vld [vmem:[%s8 + $0x5] sm:$0x1]
    %v46 = vld [vmem:[%s8 + $0x6] sm:$0x1]
    %v47 = vld [vmem:[%s2] sm:$0xf]
    %v48 = vld [vmem:[%s2 + $0x4] sm:$0xf]
    %v49 = vld [vmem:[%s2 + $0x8] sm:$0xf]
    %v50 = vld [vmem:[%s2 + $0xc] sm:$0xf]
    %v51 = vlaneseq
    %v52 = vshrl.u32 %v51, 7
    %v53 = vsub.s32 0, %v52
    %v54 = vrot.slane %v40, %v53
    %v59 = vunpack.c.l.b16 %v47
    %v60 = vunpack.c.l.b16 %v48
    %v61 = vunpack.c.l.b16 %v49
    %v62 = vunpack.c.l.b16 %v50
    %v63 = vpack.c.b16 %v60, %v59
    %v64 = vpack.c.b16 %v62, %v61
    %vm67 = vcmask 261120
    %v69 = vsel %vm67, %v36, 0
    %71 = vmatprep.subr.bf16.mxu0 0
    %72 = vmatpush1.bf16.msra.mxu0 0
    %73 = vmatprep.subr.bf16.mxu0 0
    %74 = vmatpush1.bf16.msra.mxu0 0
    %75 = vmatprep.subr.bf16.mxu0 0
    %76 = vmatpush1.bf16.msra.mxu0 0
    %77 = vmatprep.subr.bf16.mxu0 0
    %78 = vmatpush1.bf16.msra.mxu0 0
    %79 = vmatprep.subr.bf16.mxu0 0
    %80 = vmatpush1.bf16.msra.mxu0 0
    %81 = vmatprep.subr.bf16.mxu0 0
    %82 = vmatpush1.bf16.msra.mxu0 0
    %83 = vmatprep.subr.bf16.mxu0 0
    %84 = vmatpush1.bf16.msra.mxu0 %v64
    %85 = vmatprep.subr.bf16.mxu0 0
    %86 = vmatpush1.bf16.msra.mxu0 %v63
    %87 = vmatprep.subr.bf16.mxu0 0
    %88 = vmatpush2.bf16.msra.mxu0 0
    %89 = vmatprep.subr.bf16.mxu0 0
    %90 = vmatpush2.bf16.msra.mxu0 0
    %91 = vmatprep.subr.bf16.mxu0 0
    %92 = vmatpush2.bf16.msra.mxu0 0
    %93 = vmatprep.subr.bf16.mxu0 0
    %94 = vmatpush2.bf16.msra.mxu0 0
    %95 = vmatprep.subr.bf16.mxu0 0
    %96 = vmatpush2.bf16.msra.mxu0 0
    %97 = vmatprep.subr.bf16.mxu0 0
    %98 = vmatpush2.bf16.msra.mxu0 0
    %99 = vmatprep.subr.bf16.mxu0 0
    %100 = vmatpush2.bf16.msra.mxu0 0
    %101 = vmatprep.subr.bf16.mxu0 0
    %102 = vmatpush2.bf16.msra.mxu0 0
    %103 = vmatprep.mubr.bf16.mxu0 0
    %104 = vmatmul.mubr.bf16.gmra.mxu0 %v69
    %v105 = vpop.f32.mrf.mxu0
    %v106 = vadd.f32 %v54, %v105
    %v107 = vpop.f32.mrf.mxu0
    %v108 = vpop.f32.mrf.mxu0
    %v109 = vadd.f32 %v54, %v108
    %v110 = vpop.f32.mrf.mxu0
    %111 = vdwg.mxu0
    %v112 = vld [vmem:[%s3] sm:$0xf]
    %v113 = vld [vmem:[%s3 + $0x4] sm:$0xf]
    %v114 = vld [vmem:[%s3 + $0x8] sm:$0xf]
    %v115 = vld [vmem:[%s3 + $0xc] sm:$0xf]
    %v116 = vld [vmem:[%s4] sm:$0xf]
    %v117 = vld [vmem:[%s4 + $0x4] sm:$0xf]
    %v120 = vunpack.c.l.b16 %v116
    %v121 = vunpack.c.l.b16 %v117
    %v122 = vpack.c.b16 %v121, %v120
    %vm124 = vcmask 130048
    %v126 = vsel %vm124, %v39, 0
    %128 = vmatprep.subr.bf16.mxu0 0
    %129 = vmatpush1.bf16.msra.mxu0 0
    %130 = vmatprep.subr.bf16.mxu0 0
    %131 = vmatpush1.bf16.msra.mxu0 0
    %132 = vmatprep.subr.bf16.mxu0 0
    %133 = vmatpush1.bf16.msra.mxu0 0
    %134 = vmatprep.subr.bf16.mxu0 0
    %135 = vmatpush1.bf16.msra.mxu0 0
    %136 = vmatprep.subr.bf16.mxu0 0
    %137 = vmatpush1.bf16.msra.mxu0 0
    %138 = vmatprep.subr.bf16.mxu0 0
    %139 = vmatpush1.bf16.msra.mxu0 0
    %140 = vmatprep.subr.bf16.mxu0 0
    %141 = vmatpush1.bf16.msra.mxu0 0
    %142 = vmatprep.subr.bf16.mxu0 0
    %143 = vmatpush1.bf16.msra.mxu0 %v122
    %144 = vmatprep.subr.bf16.mxu0 0
    %145 = vmatpush2.bf16.msra.mxu0 0
    %146 = vmatprep.subr.bf16.mxu0 0
    %147 = vmatpush2.bf16.msra.mxu0 0
    %148 = vmatprep.subr.bf16.mxu0 0
    %149 = vmatpush2.bf16.msra.mxu0 0
    %150 = vmatprep.subr.bf16.mxu0 0
    %151 = vmatpush2.bf16.msra.mxu0 0
    %152 = vmatprep.subr.bf16.mxu0 0
    %153 = vmatpush2.bf16.msra.mxu0 0
    %154 = vmatprep.subr.bf16.mxu0 0
    %155 = vmatpush2.bf16.msra.mxu0 0
    %156 = vmatprep.subr.bf16.mxu0 0
    %157 = vmatpush2.bf16.msra.mxu0 0
    %158 = vmatprep.subr.bf16.mxu0 0
    %159 = vmatpush2.bf16.msra.mxu0 0
    %160 = vmatprep.mubr.bf16.mxu0 0
    %161 = vmatmul.mubr.bf16.gmra.mxu0 %v126
    %v162 = vpop.f32.mrf.mxu0
    %v163 = vadd.f32 0.0, %v162
    %v164 = vpop.f32.mrf.mxu0
    %v165 = vpop.f32.mrf.mxu0
    %v166 = vadd.f32 0.0, %v165
    %v167 = vpop.f32.mrf.mxu0
    %168 = vdwg.mxu0
    %v173 = vunpack.c.l.b16 %v112
    %v174 = vunpack.c.l.b16 %v113
    %v175 = vunpack.c.l.b16 %v114
    %v176 = vunpack.c.l.b16 %v115
    %v177 = vpack.c.b16 %v174, %v173
    %v178 = vpack.c.b16 %v176, %v175
    %181 = vmatprep.subr.bf16.mxu0 0
    %182 = vmatpush1.bf16.msra.mxu0 0
    %183 = vmatprep.subr.bf16.mxu0 0
    %184 = vmatpush1.bf16.msra.mxu0 0
    %185 = vmatprep.subr.bf16.mxu0 0
    %186 = vmatpush1.bf16.msra.mxu0 0
    %187 = vmatprep.subr.bf16.mxu0 0
    %188 = vmatpush1.bf16.msra.mxu0 0
    %189 = vmatprep.subr.bf16.mxu0 0
    %190 = vmatpush1.bf16.msra.mxu0 0
    %191 = vmatprep.subr.bf16.mxu0 0
    %192 = vmatpush1.bf16.msra.mxu0 0
    %193 = vmatprep.subr.bf16.mxu0 0
    %194 = vmatpush1.bf16.msra.mxu0 %v178
    %195 = vmatprep.subr.bf16.mxu0 0
    %196 = vmatpush1.bf16.msra.mxu0 %v177
    %197 = vmatprep.subr.bf16.mxu0 0
    %198 = vmatpush2.bf16.msra.mxu0 0
    %199 = vmatprep.subr.bf16.mxu0 0
    %200 = vmatpush2.bf16.msra.mxu0 0
    %201 = vmatprep.subr.bf16.mxu0 0
    %202 = vmatpush2.bf16.msra.mxu0 0
    %203 = vmatprep.subr.bf16.mxu0 0
    %204 = vmatpush2.bf16.msra.mxu0 0
    %205 = vmatprep.subr.bf16.mxu0 0
    %206 = vmatpush2.bf16.msra.mxu0 0
    %207 = vmatprep.subr.bf16.mxu0 0
    %208 = vmatpush2.bf16.msra.mxu0 0
    %209 = vmatprep.subr.bf16.mxu0 0
    %210 = vmatpush2.bf16.msra.mxu0 0
    %211 = vmatprep.subr.bf16.mxu0 0
    %212 = vmatpush2.bf16.msra.mxu0 0
    %213 = vmatprep.mubr.bf16.mxu0 0
    %214 = vmatmul.mubr.bf16.gmra.mxu0 %v69
    %v215 = vpop.f32.mrf.mxu0
    %v216 = vadd.f32 %v163, %v215
    %v217 = vpop.f32.mrf.mxu0
    %v218 = vpop.f32.mrf.mxu0
    %v219 = vadd.f32 %v166, %v218
    %v220 = vpop.f32.mrf.mxu0
    %221 = vdwg.mxu0
    %v222 = vlaneseq
    %v223 = vshrl.u32 %v222, 7
    %v224 = vsub.s32 0, %v223
    %v225 = vrot.slane %v41, %v224
    %v226 = vadd.f32 %v216, %v225
    %v227 = vadd.f32 %v219, %v225
    %vm228 = vcmp.gt.f32.partialorder %v226, 0.0
    %vm229 = vcmp.gt.f32.partialorder %v227, 0.0
    %v230 = vmin.f32 %v226, 0.0
    %v231 = vmin.f32 %v227, 0.0
    %v232 = vmul.f32 %v230, 1.442695
    %v233 = vpow.pop %v232
    %v234 = vmul.f32 %v231, 1.442695
    %v235 = vpow.pop %v234
    %v236 = vsub.f32 %v233, 1.0
    %v237 = vsub.f32 %v235, 1.0
    %v238 = vsel %vm228, %v226, %v236
    %v239 = vsel %vm229, %v227, %v237
    %v240 = vpack.c.bf16 %v239, %v238
    %v241 = vld [vmem:[%s5] sm:$0xf]
    %v242 = vld [vmem:[%s5 + $0x4] sm:$0xf]
    %v243 = vld [vmem:[%s5 + $0x8] sm:$0xf]
    %v244 = vld [vmem:[%s5 + $0xc] sm:$0xf]
    %v245 = vlaneseq
    %v246 = vshrl.u32 %v245, 7
    %v247 = vsub.s32 0, %v246
    %v248 = vrot.slane %v42, %v247
    %v253 = vunpack.c.l.b16 %v241
    %v254 = vunpack.c.l.b16 %v242
    %v255 = vunpack.c.l.b16 %v243
    %v256 = vunpack.c.l.b16 %v244
    %v257 = vpack.c.b16 %v254, %v253
    %v258 = vpack.c.b16 %v256, %v255
    %v262 = vsel %vm67, %v240, 0
    %264 = vmatprep.subr.bf16.mxu0 0
    %265 = vmatpush1.bf16.msra.mxu0 0
    %266 = vmatprep.subr.bf16.mxu0 0
    %267 = vmatpush1.bf16.msra.mxu0 0
    %268 = vmatprep.subr.bf16.mxu0 0
    %269 = vmatpush1.bf16.msra.mxu0 0
    %270 = vmatprep.subr.bf16.mxu0 0
    %271 = vmatpush1.bf16.msra.mxu0 0
    %272 = vmatprep.subr.bf16.mxu0 0
    %273 = vmatpush1.bf16.msra.mxu0 0
    %274 = vmatprep.subr.bf16.mxu0 0
    %275 = vmatpush1.bf16.msra.mxu0 0
    %276 = vmatprep.subr.bf16.mxu0 0
    %277 = vmatpush1.bf16.msra.mxu0 %v258
    %278 = vmatprep.subr.bf16.mxu0 0
    %279 = vmatpush1.bf16.msra.mxu0 %v257
    %280 = vmatprep.subr.bf16.mxu0 0
    %281 = vmatpush2.bf16.msra.mxu0 0
    %282 = vmatprep.subr.bf16.mxu0 0
    %283 = vmatpush2.bf16.msra.mxu0 0
    %284 = vmatprep.subr.bf16.mxu0 0
    %285 = vmatpush2.bf16.msra.mxu0 0
    %286 = vmatprep.subr.bf16.mxu0 0
    %287 = vmatpush2.bf16.msra.mxu0 0
    %288 = vmatprep.subr.bf16.mxu0 0
    %289 = vmatpush2.bf16.msra.mxu0 0
    %290 = vmatprep.subr.bf16.mxu0 0
    %291 = vmatpush2.bf16.msra.mxu0 0
    %292 = vmatprep.subr.bf16.mxu0 0
    %293 = vmatpush2.bf16.msra.mxu0 0
    %294 = vmatprep.subr.bf16.mxu0 0
    %295 = vmatpush2.bf16.msra.mxu0 0
    %296 = vmatprep.mubr.bf16.mxu0 0
    %297 = vmatmul.mubr.bf16.gmra.mxu0 %v262
    %v298 = vpop.f32.mrf.mxu0
    %v299 = vadd.f32 %v248, %v298
    %v300 = vpop.f32.mrf.mxu0
    %v301 = vpop.f32.mrf.mxu0
    %v302 = vadd.f32 %v248, %v301
    %v303 = vpop.f32.mrf.mxu0
    %304 = vdwg.mxu0
    %v305 = vpack.c.bf16 %v302, %v299
    %v306 = vld [vmem:[%s6] sm:$0xf]
    %v307 = vld [vmem:[%s6 + $0x4] sm:$0xf]
    %v308 = vld [vmem:[%s6 + $0x8] sm:$0xf]
    %v309 = vld [vmem:[%s6 + $0xc] sm:$0xf]
    %v310 = vld [vmem:[%s6 + $0x10] sm:$0xf]
    %v311 = vld [vmem:[%s6 + $0x14] sm:$0xf]
    %v312 = vld [vmem:[%s6 + $0x18] sm:$0xf]
    %v313 = vld [vmem:[%s6 + $0x1c] sm:$0xf]
    %v314 = vlaneseq
    %v315 = vshrl.u32 %v314, 7
    %v316 = vsub.s32 0, %v315
    %v317 = vrot.slane %v43, %v316
    %v326 = vunpack.c.l.b16 %v306
    %v327 = vunpack.c.l.b16 %v307
    %v328 = vunpack.c.l.b16 %v308
    %v329 = vunpack.c.l.b16 %v309
    %v330 = vunpack.c.l.b16 %v310
    %v331 = vunpack.c.l.b16 %v311
    %v332 = vunpack.c.l.b16 %v312
    %v333 = vunpack.c.l.b16 %v313
    %v334 = vpack.c.b16 %v327, %v326
    %v335 = vpack.c.b16 %v329, %v328
    %v336 = vpack.c.b16 %v331, %v330
    %v337 = vpack.c.b16 %v333, %v332
    %vm342 = vcmask 523264
    %v344 = vsel %vm342, %v305, 0
    %346 = vmatprep.subr.bf16.mxu0 0
    %347 = vmatpush1.bf16.msra.mxu0 0
    %348 = vmatprep.subr.bf16.mxu0 0
    %349 = vmatpush1.bf16.msra.mxu0 0
    %350 = vmatprep.subr.bf16.mxu0 0
    %351 = vmatpush1.bf16.msra.mxu0 0
    %352 = vmatprep.subr.bf16.mxu0 0
    %353 = vmatpush1.bf16.msra.mxu0 0
    %354 = vmatprep.subr.bf16.mxu0 0
    %355 = vmatpush1.bf16.msra.mxu0 %v337
    %356 = vmatprep.subr.bf16.mxu0 0
    %357 = vmatpush1.bf16.msra.mxu0 %v336
    %358 = vmatprep.subr.bf16.mxu0 0
    %359 = vmatpush1.bf16.msra.mxu0 %v335
    %360 = vmatprep.subr.bf16.mxu0 0
    %361 = vmatpush1.bf16.msra.mxu0 %v334
    %362 = vmatprep.subr.bf16.mxu0 0
    %363 = vmatpush2.bf16.msra.mxu0 0
    %364 = vmatprep.subr.bf16.mxu0 0
    %365 = vmatpush2.bf16.msra.mxu0 0
    %366 = vmatprep.subr.bf16.mxu0 0
    %367 = vmatpush2.bf16.msra.mxu0 0
    %368 = vmatprep.subr.bf16.mxu0 0
    %369 = vmatpush2.bf16.msra.mxu0 0
    %370 = vmatprep.subr.bf16.mxu0 0
    %371 = vmatpush2.bf16.msra.mxu0 0
    %372 = vmatprep.subr.bf16.mxu0 0
    %373 = vmatpush2.bf16.msra.mxu0 0
    %374 = vmatprep.subr.bf16.mxu0 0
    %375 = vmatpush2.bf16.msra.mxu0 0
    %376 = vmatprep.subr.bf16.mxu0 0
    %377 = vmatpush2.bf16.msra.mxu0 0
    %378 = vmatprep.mubr.bf16.mxu0 0
    %379 = vmatmul.mubr.bf16.gmra.mxu0 %v344
    %v380 = vpop.f32.mrf.mxu0
    %v381 = vadd.f32 %v317, %v380
    %v382 = vpop.f32.mrf.mxu0
    %v383 = vpop.f32.mrf.mxu0
    %v384 = vadd.f32 %v317, %v383
    %v385 = vpop.f32.mrf.mxu0
    %386 = vdwg.mxu0
    %v387 = vld [vmem:[%s7] sm:$0xf]
    %v388 = vld [vmem:[%s7 + $0x4] sm:$0xf]
    %v389 = vld [vmem:[%s7 + $0x8] sm:$0xf]
    %v390 = vld [vmem:[%s7 + $0xc] sm:$0xf]
    %v391 = vld [vmem:[%s7 + $0x10] sm:$0xf]
    %v392 = vld [vmem:[%s7 + $0x14] sm:$0xf]
    %v393 = vld [vmem:[%s7 + $0x18] sm:$0xf]
    %v394 = vld [vmem:[%s7 + $0x1c] sm:$0xf]
    %v395 = vlaneseq
    %v396 = vshrl.u32 %v395, 7
    %v397 = vsub.s32 0, %v396
    %v398 = vrot.slane %v44, %v397
    %v407 = vunpack.c.l.b16 %v387
    %v408 = vunpack.c.l.b16 %v388
    %v409 = vunpack.c.l.b16 %v389
    %v410 = vunpack.c.l.b16 %v390
    %v411 = vunpack.c.l.b16 %v391
    %v412 = vunpack.c.l.b16 %v392
    %v413 = vunpack.c.l.b16 %v393
    %v414 = vunpack.c.l.b16 %v394
    %v415 = vpack.c.b16 %v408, %v407
    %v416 = vpack.c.b16 %v410, %v409
    %v417 = vpack.c.b16 %v412, %v411
    %v418 = vpack.c.b16 %v414, %v413
    %423 = vmatprep.subr.bf16.mxu0 0
    %424 = vmatpush1.bf16.msra.mxu0 0
    %425 = vmatprep.subr.bf16.mxu0 0
    %426 = vmatpush1.bf16.msra.mxu0 0
    %427 = vmatprep.subr.bf16.mxu0 0
    %428 = vmatpush1.bf16.msra.mxu0 0
    %429 = vmatprep.subr.bf16.mxu0 0
    %430 = vmatpush1.bf16.msra.mxu0 0
    %431 = vmatprep.subr.bf16.mxu0 0
    %432 = vmatpush1.bf16.msra.mxu0 %v418
    %433 = vmatprep.subr.bf16.mxu0 0
    %434 = vmatpush1.bf16.msra.mxu0 %v417
    %435 = vmatprep.subr.bf16.mxu0 0
    %436 = vmatpush1.bf16.msra.mxu0 %v416
    %437 = vmatprep.subr.bf16.mxu0 0
    %438 = vmatpush1.bf16.msra.mxu0 %v415
    %439 = vmatprep.subr.bf16.mxu0 0
    %440 = vmatpush2.bf16.msra.mxu0 0
    %441 = vmatprep.subr.bf16.mxu0 0
    %442 = vmatpush2.bf16.msra.mxu0 0
    %443 = vmatprep.subr.bf16.mxu0 0
    %444 = vmatpush2.bf16.msra.mxu0 0
    %445 = vmatprep.subr.bf16.mxu0 0
    %446 = vmatpush2.bf16.msra.mxu0 0
    %447 = vmatprep.subr.bf16.mxu0 0
    %448 = vmatpush2.bf16.msra.mxu0 0
    %449 = vmatprep.subr.bf16.mxu0 0
    %450 = vmatpush2.bf16.msra.mxu0 0
    %451 = vmatprep.subr.bf16.mxu0 0
    %452 = vmatpush2.bf16.msra.mxu0 0
    %453 = vmatprep.subr.bf16.mxu0 0
    %454 = vmatpush2.bf16.msra.mxu0 0
    %455 = vmatprep.mubr.bf16.mxu0 0
    %456 = vmatmul.mubr.bf16.gmra.mxu0 %v344
    %v457 = vpop.f32.mrf.mxu0
    %v458 = vadd.f32 %v398, %v457
    %v459 = vpop.f32.mrf.mxu0
    %v460 = vpop.f32.mrf.mxu0
    %v461 = vadd.f32 %v398, %v460
    %v462 = vpop.f32.mrf.mxu0
    %463 = vdwg.mxu0
    %v464 = vxor.u32 %v458, 2147483648
    %v465 = vxor.u32 %v461, 2147483648
    %v466 = vmul.f32 %v464, 1.442695
    %v467 = vpow.pop %v466
    %v468 = vmul.f32 %v465, 1.442695
    %v469 = vpow.pop %v468
    %v470 = vadd.f32 %v467, 1.0
    %v471 = vadd.f32 %v469, 1.0
    %v472 = vrcp.pop %v470
    %v473 = vmul.f32 1.0, %v472
    %v474 = vrcp.pop %v471
    %v475 = vmul.f32 1.0, %v474
    %v476 = vmul.f32 %v381, %v473
    %v477 = vmul.f32 %v384, %v475
    %v478 = vadd.f32 %v476, %v106
    %v479 = vadd.f32 %v477, %v109
    %v480 = vsel %vm342, %v478, 0.0
    %481 = vadd.xlane.f32.xlu0 %v480
    %v482 = vpop.xlane.xlu0 %481
    %v483 = vsel %vm342, %v479, 0.0
    %484 = vadd.xlane.f32.xlu0 %v483
    %v485 = vpop.xlane.xlu0 %484
    %v486 = vrcp.pop 64.0
    %v487 = vmul.f32 %v482, %v486
    %v488 = vmul.f32 %v485, %v486
    %v489 = vsub.f32 %v478, %v487
    %v490 = vsub.f32 %v479, %v488
    %v491 = vmul.f32 %v489, %v489
    %v492 = vmul.f32 %v490, %v490
    %v493 = vsel %vm342, %v491, 0.0
    %494 = vadd.xlane.f32.xlu0 %v493
    %v495 = vpop.xlane.xlu0 %494
    %v496 = vsel %vm342, %v492, 0.0
    %497 = vadd.xlane.f32.xlu0 %v496
    %v498 = vpop.xlane.xlu0 %497
    %v499 = vmul.f32 %v495, %v486
    %v500 = vmul.f32 %v498, %v486
    %v501 = vadd.f32 %v499, 1e-05
    %v502 = vadd.f32 %v500, 1e-05
    %v503 = vrsqrt.pop %v501
    %v504 = vrsqrt.pop %v502
    %v505 = vmul.f32 %v489, %v503
    %v506 = vmul.f32 %v490, %v504
    %v507 = vlaneseq
    %v508 = vshrl.u32 %v507, 7
    %v509 = vsub.s32 0, %v508
    %v510 = vrot.slane %v45, %v509
    %v511 = vmul.f32 %v505, %v510
    %v512 = vmul.f32 %v506, %v510
    %v513 = vlaneseq
    %v514 = vshrl.u32 %v513, 7
    %v515 = vsub.s32 0, %v514
    %v516 = vrot.slane %v46, %v515
    %v517 = vadd.f32 %v511, %v516
    %v518 = vadd.f32 %v512, %v516
    %519 = vst.msk [vmem:[#allocation2] sm:$0xff] %vm342, %v517
    %520 = vst.msk [vmem:[#allocation2 + $0x8] sm:$0xff] %vm342, %v518
    // Predicated region
    $region38: #{grn_forward.1} parent=1 // pred_check
      _
    $region39: #{grn_forward.1} parent=1 // pred_check_branch
      %522 = sbr.rel (0) target = $region41
    $region40: #{grn_forward.1} parent=1 // pred_region
      %s524 = ssub.s32 256, 256
      %525 = vsyncadd [#allocation3], %s524
      %s526 = sshll.u32 [#allocation2], 4
      %s527 = int_to_ptr.vmem [resolvable:$true] %s526
      %532 = dma.vmem_to_hbm [thread:$0]  %s527, 256, %s9, [#allocation3], 128, 128, 8
    $region41: #{grn_forward.1} parent=1 // pred_fallthru
      _
    // Predicated region
    $region42: #{grn_forward.1} parent=1 // pred_check
      _
    $region43: #{grn_forward.1} parent=1 // pred_check_branch
      %534 = sbr.rel (0) target = $region45
    $region44: #{grn_forward.1} parent=1 // pred_region
      %535 = dma.done [#allocation3], 256
    $region45: #{grn_forward.1} parent=1 // pred_fallthru
      _
    %536 = vsyncpa [#allocation3], 1

</llo_original>
